<compile_context>
chip_gen: v5e
topology: v5e:2x2
jax: 0.10.0
libtpu: 0.0.40
codegen_flags: <defaults>
</compile_context>

<pallas_src>
import numpy as np
import jax
import jax.numpy as jnp
from jax.experimental import pallas as pl
from jax.experimental.pallas import tpu as pltpu

_LANES_IN = 256    # input lanes per slab row  (128 spin pairs)
_LANES_OUT = 128   # output lanes per slab row (128 shell indices)


def _make_deinterleave_matrix() -> np.ndarray:
    """P[2j, j] = 1, P[2j+1, j] = 2  (shape (256, 128), bf16-exact values)."""
    p = np.zeros((_LANES_IN, _LANES_OUT), dtype=np.float32)
    j = np.arange(_LANES_OUT)
    p[2 * j, j] = 1.0
    p[2 * j + 1, j] = 2.0
    return p


_P_NP = _make_deinterleave_matrix()


def _state2shell_kernel(x_ref, p_ref, o_ref):
    # clamp_min(0): spins {-1,+1} -> occupations {0,1}; cast happens in-kernel
    # so the wrapper never does a separate full-pass dtype conversion.
    x = jnp.maximum(x_ref[...], 0).astype(jnp.bfloat16)
    # shell[:, j] = occ[:, 2j] * 1 + occ[:, 2j+1] * 2   (exact in bf16 / f32)
    shell = jnp.dot(x, p_ref[...], preferred_element_type=jnp.float32)
    o_ref[...] = shell.astype(jnp.int32)


def _run_slab_kernel(x2: jax.Array, p: jax.Array, block_rows: int) -> jax.Array:
    rows = x2.shape[0]
    tr = min(block_rows, rows)
    grid = (pl.cdiv(rows, tr),)
    return pl.pallas_call(
        _state2shell_kernel,
        out_shape=jax.ShapeDtypeStruct((rows, _LANES_OUT), jnp.int32),
        grid=grid,
        in_specs=[
            pl.BlockSpec((tr, _LANES_IN), lambda i: (i, 0)),
            # Constant block index -> the 64 KiB P tile is DMA'd once and stays
            # resident across all grid steps.
            pl.BlockSpec((_LANES_IN, _LANES_OUT), lambda i: (0, 0)),
        ],
        out_specs=pl.BlockSpec((tr, _LANES_OUT), lambda i: (i, 0)),
        compiler_params=pltpu.CompilerParams(
            # Row axis is embarrassingly parallel (megacore sharding on v7x).
            dimension_semantics=("parallel",),
            # tr=4096 f32 double-buffered footprint ~12 MiB; raise above v5e's
            # 16 MiB scoped default, stay well under v7x's 64 MiB physical VMEM.
            vmem_limit_bytes=32 * 1024 * 1024,
        ),
    )(x2, p)


def state2shell(states: jax.Array, block_rows: int = 4096) -> jax.Array:
    """Pallas port of Base.state2shell.

    Args:
      states: (batch, num_sites) float spin configurations (spins in {-1, +1}).
              Any float dtype (f32 or bf16) — clamped/cast inside the kernel.
    Returns:
      (batch, num_sites // 2) int32 shell indices in {0, 1, 2, 3}.
      (torch returns int64; widening is left to the consumer to avoid a second
       full pass over the output and a global x64 flag.)
    """
    bs, num_sites = states.shape
    assert num_sites % 2 == 0, "num_sites must be even (pairs of qubits)"
    num_shells = num_sites // 2
    total = bs * num_sites

    flat = states.reshape(-1)               # free, contiguous reshape
    rows_full = total // _LANES_IN          # full 256-lane slab rows
    rem = total - rows_full * _LANES_IN     # ragged tail (< 256 spins, even)

    pieces = []
    if rows_full > 0:
        x2 = flat[: rows_full * _LANES_IN].reshape(rows_full, _LANES_IN)
        p = jnp.asarray(_P_NP, dtype=jnp.bfloat16)
        out2 = _run_slab_kernel(x2, p, block_rows)
        pieces.append(out2.reshape(-1))
    if rem > 0:
        # Tiny (<256-element) tail handled in pure JAX; avoids padding / an
        # extra full-array HBM pass for ragged problem sizes.
        t = jnp.maximum(flat[rows_full * _LANES_IN:], 0).reshape(-1, 2)
        pieces.append((t[:, 0] + 2.0 * t[:, 1]).astype(jnp.int32))

    shell_flat = pieces[0] if len(pieces) == 1 else jnp.concatenate(pieces)
    return shell_flat.reshape(bs, num_shells)


def _state2shell_ref(states: jax.Array) -> jax.Array:
    """Pure-JAX reference mirroring the PyTorch implementation."""
    bs = states.shape[0]
    weights = jnp.asarray([1.0, 2.0], dtype=jnp.float32)
    occ = jnp.maximum(states.reshape(bs, -1, 2).astype(jnp.float32), 0.0)
    return (occ * weights).sum(-1).astype(jnp.int32)


if __name__ == "__main__":
    key = jax.random.PRNGKey(0)
    k1, k2 = jax.random.split(key)

    # Primary case: batch=8, num_sites=32 -> 256 spins = exactly one 256-lane
    # slab row; exercises the Pallas kernel path end-to-end.
    spins = jnp.where(jax.random.bernoulli(k1, 0.5, (8, 32)), 1.0, -1.0)
    spins = spins.astype(jnp.float32)
    shell = jax.block_until_ready(state2shell(spins))
    shell_ref = _state2shell_ref(spins)
    assert shell.shape == (8, 16)
    assert shell.dtype == jnp.int32
    assert bool(jnp.all(shell == shell_ref))

    # Ragged case: batch=33, num_sites=30 -> 990 spins = 3 full slab rows via
    # the kernel + a 222-element pure-JAX tail (no full-array pad pass).
    spins2 = jnp.where(jax.random.bernoulli(k2, 0.5, (33, 30)), 1.0, -1.0)
    spins2 = spins2.astype(jnp.float32)
    shell2 = jax.block_until_ready(state2shell(spins2))
    shell2_ref = _state2shell_ref(spins2)
    assert shell2.shape == (33, 15)
    assert bool(jnp.all(shell2 == shell2_ref))

    print("KERNEL_OK")
</pallas_src>

<mosaic_0001>
module attributes {stable_mosaic.version = 11 : i64} {
  func.func @_state2shell_kernel(%arg0: i32, %arg1: memref<1x256xf32, #tpu.memory_space<vmem>>, %arg2: memref<256x128xbf16, #tpu.memory_space<vmem>>, %arg3: memref<1x128xi32, #tpu.memory_space<vmem>>) attributes {dimension_semantics = [#tpu.dimension_semantics<parallel>], iteration_bounds = array<i64: 1>, scalar_prefetch = 0 : i64, scratch_operands = 0 : i64, tpu.core_type = #tpu.core_type<tc>, window_params = [{transform_indices = @transform_0, window_bounds = array<i64: 1, 256>}, {pipeline_mode = #tpu.pipeline_mode<synchronous>, transform_indices = @transform_1, window_bounds = array<i64: 256, 128>}, {transform_indices = @transform_2, window_bounds = array<i64: 1, 128>}]} {
    %c0 = arith.constant 0 : index
    %c0_0 = arith.constant 0 : index
    %0 = vector.load %arg1[%c0, %c0_0] : memref<1x256xf32, #tpu.memory_space<vmem>>, vector<1x256xf32>
    %cst = arith.constant 0.000000e+00 : f32
    %1 = vector.broadcast %cst : f32 to vector<1x256xf32>
    %2 = arith.maximumf %0, %1 : vector<1x256xf32>
    %3 = arith.truncf %2 : vector<1x256xf32> to vector<1x256xbf16>
    %c0_1 = arith.constant 0 : index
    %c0_2 = arith.constant 0 : index
    %4 = vector.load %arg2[%c0_1, %c0_2] : memref<256x128xbf16, #tpu.memory_space<vmem>>, vector<256x128xbf16>
    %cst_3 = arith.constant dense<0.000000e+00> : vector<1x128xf32>
    %5 = tpu.matmul %3, %4, %cst_3 {dimension_numbers = #tpu.dot_dimension_numbers<[1], [0], [0], [1], [0, 0, 1, 1], [], []>} : vector<1x256xbf16>, vector<256x128xbf16>, vector<1x128xf32> -> vector<1x128xf32>
    %6 = arith.fptosi %5 : vector<1x128xf32> to vector<1x128xi32>
    %c0_4 = arith.constant 0 : index
    %c0_5 = arith.constant 0 : index
    %7 = vector.load %arg3[%c0_4, %c0_5] : memref<1x128xi32, #tpu.memory_space<vmem>>, vector<1x128xi32>
    tpu.vector_store %arg3[%c0_4, %c0_5], %6 {strides = array<i32>} : memref<1x128xi32, #tpu.memory_space<vmem>>, vector<1x128xi32>,
    return
  }
  func.func @transform_0(%arg0: i32) -> (i32, i32) {
    %c0_i32 = arith.constant 0 : i32
    %c0_i32_0 = arith.constant 0 : i32
    return %arg0, %c0_i32 : i32, i32
  }
  func.func @transform_1(%arg0: i32) -> (i32, i32) {
    %c0_i32 = arith.constant 0 : i32
    %c0_i32_0 = arith.constant 0 : i32
    %c0_i32_1 = arith.constant 0 : i32
    return %c0_i32, %c0_i32_0 : i32, i32
  }
  func.func @transform_2(%arg0: i32) -> (i32, i32) {
    %c0_i32 = arith.constant 0 : i32
    %c0_i32_0 = arith.constant 0 : i32
    return %arg0, %c0_i32 : i32, i32
  }
}

</mosaic_0001>

<llo_original>
// kernel: tpu_custom_call.1
$region0: #{tpu_custom_call.1}
  #allocation0 [shape = 'u32[]', space=smem, size = 0x4, offset = 0x4, fixed_abs, tag = 'smem constant byte address 0x4 - core index']
  #allocation1 [shape = 'u32[72,128]{1,0:T(1,128)}', space=vmem, size = 0x9000, scoped, tag = 'internal scratch']
  %s0 = inlined_call_operand.hbm [shape: f32[1,256], index: 0, kind: input, shape index: {}]
  %s1 = inlined_call_operand.hbm [shape: bf16[256,128], index: 1, kind: input, shape index: {}]
  %s2 = inlined_call_operand.hbm [shape: s32[1,128], index: 2, kind: output, shape index: {}]
  %s3 = sld [smem:[#allocation0]]
  $region26: #{tpu_custom_call.1} parent=0
    _
  %s5 = ssub.s32 1, %s3
  %s6 = scalar_select 0, %s5, %s3
  $region1: #{tpu_custom_call.1} parent=0
    #allocation2 [shape = 'u8[1024]{0}', space=vmem, size = 0x400, scoped, tag = 'input window, operand 0, single buffered']
    #allocation3 [shape = 's32[1]{0}', space=sflag, size = 0x4, scoped, tag = 'scoped memory for tpu_custom_call.1']
    #allocation4 [shape = 's32[1]{0}', space=sflag, size = 0x4, scoped, tag = 'scoped memory for tpu_custom_call.1']
    #allocation5 [shape = 'u8[65536]{0}', space=vmem, size = 0x10000, scoped, tag = 'input window, operand 1, single buffered']
    #allocation6 [shape = 's32[1]{0}', space=sflag, size = 0x4, scoped, tag = 'scoped memory for tpu_custom_call.1']
    #allocation7 [shape = 'u8[512]{0}', space=vmem, size = 0x400, scoped, tag = 'output window, operand 0, single buffered']
    %7 = vsyncpa [#allocation3], 0
    %8 = vsyncpa [#allocation6], 0
    %9 = vsyncpa [#allocation4], 0
    // Predicated region
    $region2: #{tpu_custom_call.1} parent=1 // pred_check
      _
    $region3: #{tpu_custom_call.1} parent=1 // pred_check_branch
      %11 = sbr.rel (0) target = $region5
    $region4: #{tpu_custom_call.1} parent=1 // pred_region
      %13 = vsyncadd [#allocation3], 0
      %s15 = sshll.u32 %s0, 4
      %s16 = int_to_ptr.hbm [resolvable:$true] %s15
      %s17 = sshll.u32 [#allocation2], 4
      %s18 = int_to_ptr.vmem [resolvable:$true] %s17
      %20 = dma.hbm_to_vmem [thread:$0]  %s16, 32, %s18, [#allocation3]
    $region5: #{tpu_custom_call.1} parent=1 // pred_fallthru
      _
    // Predicated region
    $region6: #{tpu_custom_call.1} parent=1 // pred_check
      _
    $region7: #{tpu_custom_call.1} parent=1 // pred_check_branch
      %22 = sbr.rel (0) target = $region9
    $region8: #{tpu_custom_call.1} parent=1 // pred_region
      %24 = vsyncadd [#allocation6], 0
      %s25 = sshll.u32 %s1, 4
      %s26 = int_to_ptr.hbm [resolvable:$true] %s25
      %s27 = sshll.u32 [#allocation5], 4
      %s28 = int_to_ptr.vmem [resolvable:$true] %s27
      %33 = dma.hbm_to_vmem [thread:$0]  %s26, 2048, %s28, [#allocation6], 64, 64, 4
    $region9: #{tpu_custom_call.1} parent=1 // pred_fallthru
      _
    // Predicated region
    $region10: #{tpu_custom_call.1} parent=1 // pred_check
      _
    $region11: #{tpu_custom_call.1} parent=1 // pred_check_branch
      %35 = sbr.rel (0) target = $region13
    $region12: #{tpu_custom_call.1} parent=1 // pred_region
      %37 = dma.done [#allocation3], 32
    $region13: #{tpu_custom_call.1} parent=1 // pred_fallthru
      _
    // Predicated region
    $region14: #{tpu_custom_call.1} parent=1 // pred_check
      _
    $region15: #{tpu_custom_call.1} parent=1 // pred_check_branch
      %39 = sbr.rel (0) target = $region17
    $region16: #{tpu_custom_call.1} parent=1 // pred_region
      %41 = dma.done [#allocation6], 2048
    $region17: #{tpu_custom_call.1} parent=1 // pred_fallthru
      _
    %v42 = vld [vmem:[#allocation2] sm:$0x3]
    %v43 = vmax.f32 %v42, 0.0
    %v45 = vperm.slane %v43, 0
    %v46 = vperm.slane %v43, 1
    %v49 = vpack.c.bf16 %v45, %v45
    %v50 = vpack.c.bf16 %v46, %v46
    %v51 = vld [vmem:[#allocation5] sm:$0xf]
    %v52 = vld [vmem:[#allocation5 + $0x4] sm:$0xf]
    %v53 = vld [vmem:[#allocation5 + $0x8] sm:$0xf]
    %v54 = vld [vmem:[#allocation5 + $0xc] sm:$0xf]
    %v55 = vld [vmem:[#allocation5 + $0x10] sm:$0xf]
    %v56 = vld [vmem:[#allocation5 + $0x14] sm:$0xf]
    %v57 = vld [vmem:[#allocation5 + $0x18] sm:$0xf]
    %v58 = vld [vmem:[#allocation5 + $0x1c] sm:$0xf]
    %v59 = vld [vmem:[#allocation5 + $0x20] sm:$0xf]
    %v60 = vld [vmem:[#allocation5 + $0x24] sm:$0xf]
    %v61 = vld [vmem:[#allocation5 + $0x28] sm:$0xf]
    %v62 = vld [vmem:[#allocation5 + $0x2c] sm:$0xf]
    %v63 = vld [vmem:[#allocation5 + $0x30] sm:$0xf]
    %v64 = vld [vmem:[#allocation5 + $0x34] sm:$0xf]
    %v65 = vld [vmem:[#allocation5 + $0x38] sm:$0xf]
    %v66 = vld [vmem:[#allocation5 + $0x3c] sm:$0xf]
    %v67 = vld [vmem:[#allocation5 + $0x40] sm:$0xf]
    %v68 = vld [vmem:[#allocation5 + $0x44] sm:$0xf]
    %v69 = vld [vmem:[#allocation5 + $0x48] sm:$0xf]
    %v70 = vld [vmem:[#allocation5 + $0x4c] sm:$0xf]
    %v71 = vld [vmem:[#allocation5 + $0x50] sm:$0xf]
    %v72 = vld [vmem:[#allocation5 + $0x54] sm:$0xf]
    %v73 = vld [vmem:[#allocation5 + $0x58] sm:$0xf]
    %v74 = vld [vmem:[#allocation5 + $0x5c] sm:$0xf]
    %v75 = vld [vmem:[#allocation5 + $0x60] sm:$0xf]
    %v76 = vld [vmem:[#allocation5 + $0x64] sm:$0xf]
    %v77 = vld [vmem:[#allocation5 + $0x68] sm:$0xf]
    %v78 = vld [vmem:[#allocation5 + $0x6c] sm:$0xf]
    %v79 = vld [vmem:[#allocation5 + $0x70] sm:$0xf]
    %v80 = vld [vmem:[#allocation5 + $0x74] sm:$0xf]
    %v81 = vld [vmem:[#allocation5 + $0x78] sm:$0xf]
    %v82 = vld [vmem:[#allocation5 + $0x7c] sm:$0xf]
    %v115 = vunpack.c.l.b16 %v51
    %v116 = vunpack.c.l.b16 %v52
    %v117 = vunpack.c.l.b16 %v53
    %v118 = vunpack.c.l.b16 %v54
    %v119 = vunpack.c.l.b16 %v55
    %v120 = vunpack.c.l.b16 %v56
    %v121 = vunpack.c.l.b16 %v57
    %v122 = vunpack.c.l.b16 %v58
    %v123 = vunpack.c.l.b16 %v59
    %v124 = vunpack.c.l.b16 %v60
    %v125 = vunpack.c.l.b16 %v61
    %v126 = vunpack.c.l.b16 %v62
    %v127 = vunpack.c.l.b16 %v63
    %v128 = vunpack.c.l.b16 %v64
    %v129 = vunpack.c.l.b16 %v65
    %v130 = vunpack.c.l.b16 %v66
    %v131 = vunpack.c.l.b16 %v67
    %v132 = vunpack.c.l.b16 %v68
    %v133 = vunpack.c.l.b16 %v69
    %v134 = vunpack.c.l.b16 %v70
    %v135 = vunpack.c.l.b16 %v71
    %v136 = vunpack.c.l.b16 %v72
    %v137 = vunpack.c.l.b16 %v73
    %v138 = vunpack.c.l.b16 %v74
    %v139 = vunpack.c.l.b16 %v75
    %v140 = vunpack.c.l.b16 %v76
    %v141 = vunpack.c.l.b16 %v77
    %v142 = vunpack.c.l.b16 %v78
    %v143 = vunpack.c.l.b16 %v79
    %v144 = vunpack.c.l.b16 %v80
    %v145 = vunpack.c.l.b16 %v81
    %v146 = vunpack.c.l.b16 %v82
    %v147 = vpack.c.b16 %v116, %v115
    %v148 = vpack.c.b16 %v118, %v117
    %v149 = vpack.c.b16 %v120, %v119
    %v150 = vpack.c.b16 %v122, %v121
    %v151 = vpack.c.b16 %v124, %v123
    %v152 = vpack.c.b16 %v126, %v125
    %v153 = vpack.c.b16 %v128, %v127
    %v154 = vpack.c.b16 %v130, %v129
    %v155 = vpack.c.b16 %v132, %v131
    %v156 = vpack.c.b16 %v134, %v133
    %v157 = vpack.c.b16 %v136, %v135
    %v158 = vpack.c.b16 %v138, %v137
    %v159 = vpack.c.b16 %v140, %v139
    %v160 = vpack.c.b16 %v142, %v141
    %v161 = vpack.c.b16 %v144, %v143
    %v162 = vpack.c.b16 %v146, %v145
    %179 = vmatpush.bf16.msra.mxu0 %v154
    %180 = vmatpush.bf16.msra.mxu0 %v153
    %181 = vmatpush.bf16.msra.mxu0 %v152
    %182 = vmatpush.bf16.msra.mxu0 %v151
    %183 = vmatpush.bf16.msra.mxu0 %v150
    %184 = vmatpush.bf16.msra.mxu0 %v149
    %185 = vmatpush.bf16.msra.mxu0 %v148
    %186 = vmatpush.bf16.msra.mxu0 %v147
    %187 = vmatmul.bf16.gmra.mxu0 %v49
    %v188 = vpop.f32.mrf.mxu0
    %v189 = vadd.f32 0.0, %v188
    %v190 = vpop.f32.mrf.mxu0
    %191 = vdwg.mxu0
    %192 = vmatpush.bf16.msra.mxu0 %v162
    %193 = vmatpush.bf16.msra.mxu0 %v161
    %194 = vmatpush.bf16.msra.mxu0 %v160
    %195 = vmatpush.bf16.msra.mxu0 %v159
    %196 = vmatpush.bf16.msra.mxu0 %v158
    %197 = vmatpush.bf16.msra.mxu0 %v157
    %198 = vmatpush.bf16.msra.mxu0 %v156
    %199 = vmatpush.bf16.msra.mxu0 %v155
    %200 = vmatmul.bf16.gmra.mxu0 %v50
    %v201 = vpop.f32.mrf.mxu0
    %v202 = vadd.f32 %v189, %v201
    %v203 = vpop.f32.mrf.mxu0
    %204 = vdwg.mxu0
    %v205 = vcvt.f32.s32.to.zero.pseudo %v202
    %206 = vst [vmem:[#allocation7] sm:$0x1] %v205
    // Predicated region
    $region18: #{tpu_custom_call.1} parent=1 // pred_check
      _
    $region19: #{tpu_custom_call.1} parent=1 // pred_check_branch
      %208 = sbr.rel (0) target = $region21
    $region20: #{tpu_custom_call.1} parent=1 // pred_region
      %210 = vsyncadd [#allocation4], 0
      %s212 = sshll.u32 [#allocation7], 4
      %s213 = int_to_ptr.vmem [resolvable:$true] %s212
      %s214 = sshll.u32 %s2, 4
      %s215 = int_to_ptr.hbm [resolvable:$true] %s214
      %217 = dma.vmem_to_hbm [thread:$0]  %s213, 16, %s215, [#allocation4]
    $region21: #{tpu_custom_call.1} parent=1 // pred_fallthru
      _
    // Predicated region
    $region22: #{tpu_custom_call.1} parent=1 // pred_check
      _
    $region23: #{tpu_custom_call.1} parent=1 // pred_check_branch
      %219 = sbr.rel (0) target = $region25
    $region24: #{tpu_custom_call.1} parent=1 // pred_region
      %221 = dma.done [#allocation4], 16
    $region25: #{tpu_custom_call.1} parent=1 // pred_fallthru
      _
    %222 = vsyncpa [#allocation3], 1
    %223 = vsyncpa [#allocation6], 1
    %224 = vsyncpa [#allocation4], 1

</llo_original>
